<compile_context>
chip_gen: v7x
topology: tpu7x:2x2x1
jax: 0.10.0
libtpu: 0.0.40
codegen_flags: <defaults>
</compile_context>

<pallas_src>
import functools

import jax
import jax.numpy as jnp
from jax.experimental import pallas as pl
from jax.experimental.pallas import tpu as pltpu


# ------------------------------ kernel bodies ------------------------------

def _prep_tile(f, k_step, *, tk, k_valid, mask_tail, cast_bf16):
    """Mask the ragged K tail (zero columns are exact for F F^T) and optionally
    cast to bf16 right before the MXU (f32 accumulation is kept)."""
    if mask_tail:
        col = k_step * tk + jax.lax.broadcasted_iota(jnp.int32, f.shape, 1)
        f = jnp.where(col < k_valid, f, jnp.zeros_like(f))
    if cast_bf16 and f.dtype == jnp.float32:
        f = f.astype(jnp.bfloat16)
    return f


def _ffT(a, b):
    # Contract axis 1 of both operands: (m, tk) x (n, tk) -> (m, n), f32 acc.
    return jax.lax.dot_general(
        a, b, dimension_numbers=(((1,), (1,)), ((), ())),
        preferred_element_type=jnp.float32)


def _gram_kernel(f_ref, g_ref, *, scale, prep):
    """Gram-only, un-tiled M: accumulate F F^T into the resident f32 output."""
    k = pl.program_id(0)

    @pl.when(k == 0)
    def _():
        g_ref[...] = jnp.zeros_like(g_ref)

    f = prep(f_ref[...], k)
    g_ref[...] += _ffT(f, f)

    @pl.when(k == pl.num_programs(0) - 1)
    def _():
        g_ref[...] *= scale              # G = F F^T / (a*b*c*d), in place


def _gram_rows_kernel(fi_ref, fa_ref, g_ref, *, scale, prep):
    """Gram, row-tiled M.  grid = (row blocks, K steps); rows are 'parallel'
    so both TensorCores are used on v7x and the resident block is (tm, M)."""
    k = pl.program_id(1)

    @pl.when(k == 0)
    def _():
        g_ref[...] = jnp.zeros_like(g_ref)

    fi = prep(fi_ref[...], k)            # (tm, tk) rows of this output block
    fa = prep(fa_ref[...], k)            # (M, tk)  all rows
    g_ref[...] += _ffT(fi, fa)

    @pl.when(k == pl.num_programs(1) - 1)
    def _():
        g_ref[...] *= scale


def _loss_kernel(f_ref, t_ref, loss_ref, acc_ref, *, scale, inv_n, prep):
    """Fused gram + MSE, un-tiled M: gram stays purely in VMEM scratch."""
    k = pl.program_id(0)

    @pl.when(k == 0)
    def _():
        acc_ref[...] = jnp.zeros_like(acc_ref)
        loss_ref[...] = jnp.zeros_like(loss_ref)     # robustness: init output early

    f = prep(f_ref[...], k)
    acc_ref[...] += _ffT(f, f)

    @pl.when(k == pl.num_programs(0) - 1)
    def _():
        diff = acc_ref[...] * scale - t_ref[...].astype(jnp.float32)
        partial = jnp.sum(diff * diff) * inv_n       # mse_loss, reduction='mean'
        loss_ref[...] = jnp.broadcast_to(partial, loss_ref.shape)


def _loss_rows_kernel(fi_ref, fa_ref, t_ref, loss_ref, acc_ref, *, scale, inv_n, prep):
    """Fused gram + MSE, row-tiled M: each row block emits a partial loss that
    the wrapper sums (keeps the row axis 'parallel' for v7x dual-TC)."""
    k = pl.program_id(1)

    @pl.when(k == 0)
    def _():
        acc_ref[...] = jnp.zeros_like(acc_ref)
        loss_ref[...] = jnp.zeros_like(loss_ref)

    fi = prep(fi_ref[...], k)
    fa = prep(fa_ref[...], k)
    acc_ref[...] += _ffT(fi, fa)

    @pl.when(k == pl.num_programs(1) - 1)
    def _():
        diff = acc_ref[...] * scale - t_ref[...].astype(jnp.float32)
        partial = jnp.sum(diff * diff) * inv_n
        loss_ref[...] = jnp.broadcast_to(partial, loss_ref.shape)


# --------------------------- planning helpers -------------------------------

def _vmem_limit_bytes():
    """Generation-aware VMEM limit (v5e/v6e: 128 MiB phys, v7x: 64 MiB)."""
    try:
        cap = int(pltpu.get_tpu_info().vmem_capacity_bytes)
    except Exception:
        cap = 64 * 1024 * 1024           # conservative (v7x-sized) fallback
    return max(min((cap * 3) // 4, 96 * 1024 * 1024), 32 * 1024 * 1024)


def _choose_k_tiling(K, stream_rows, itemsize, fixed_bytes, vmem_limit,
                     k_block=None, max_tk=16384):
    """Pick (tk, k_steps, mask_tail).

    tk is either K itself (single step, exact, no mask) or a multiple of 128
    whose last, partially out-of-bounds tile is masked inside the kernel.
    `stream_rows` = rows of F streamed per K step (Pallas double-buffers them).
    """
    if k_block is not None:
        tk = int(k_block)
        if tk <= 0 or (tk != K and tk % 128 != 0):
            raise ValueError("k_block must be a positive multiple of 128 (or == K)")
        if tk >= K:
            return K, 1, False
        return tk, (K + tk - 1) // tk, (K % tk) != 0

    avail = max(vmem_limit - fixed_bytes, 2 * stream_rows * 128 * itemsize)
    tk_cap = avail // (2 * stream_rows * itemsize)
    tk_cap = max(128, min(max_tk, (tk_cap // 128) * 128))
    if K <= tk_cap:
        return K, 1, False               # whole K in one tile (full dim, exact)
    tk = tk_cap
    if K % 128 == 0:                     # prefer an even divisor: full last DMA, no mask
        n = K // 128
        for d in range(tk_cap // 128, 0, -1):
            if n % d == 0:
                if 128 * d >= max(1024, tk_cap // 2):
                    tk = 128 * d
                break
    return tk, (K + tk - 1) // tk, (K % tk) != 0


def _choose_row_block(M, vmem_limit):
    """Row-tile the (M, M) gram only when it pays: large M (dual-TC on v7x,
    VMEM fit for the resident state).  Small/medium M stays un-tiled so F is
    read from HBM exactly once."""
    if M % 8 != 0:
        return None                      # need 8-aligned row blocks
    resident_per_row = 2 * M * 4         # two (rows, M) f32 resident buffers
    budget = int(vmem_limit * 0.45)
    if M <= 1024 and M * resident_per_row <= budget:
        return None
    target = max(8, min(M // 2, budget // resident_per_row))
    tm = (target // 8) * 8
    while tm >= 8 and M % tm != 0:
        tm -= 8
    if tm < 8 or tm >= M:
        return None
    return tm


def _resolve_row_block(row_block, M, vmem_limit):
    if row_block is None:
        return _choose_row_block(M, vmem_limit)
    tm = int(row_block)
    if tm >= M:
        return None
    if tm <= 0 or tm % 8 != 0 or M % tm != 0:
        raise ValueError(
            f"row_block={row_block} must be a positive multiple of 8 dividing M={M}")
    return tm


def _as_feature_matrix(x):
    a, b, c, d = x.shape
    M, K = a * b, c * d
    # Native dtype in HBM (bf16 activations stream half the bytes); f32 accumulation.
    return x.reshape(M, K), M, K, 1.0 / float(a * b * c * d)


def _plan(M, K, itemsize, vmem_limit, cast_bf16, row_block, k_block):
    tm = _resolve_row_block(row_block, M, vmem_limit)
    rows = M if tm is None else tm
    stream_rows = M if tm is None else tm + M
    fixed = 2 * rows * M * 4 + (1 << 20)         # resident (rows, M) f32 state + slack
    tk, k_steps, mask_tail = _choose_k_tiling(
        K, stream_rows, itemsize, fixed, vmem_limit, k_block)
    prep = functools.partial(_prep_tile, tk=tk, k_valid=K,
                             mask_tail=mask_tail, cast_bf16=cast_bf16)
    params = pltpu.CompilerParams(
        dimension_semantics=("arbitrary",) if tm is None else ("parallel", "arbitrary"),
        vmem_limit_bytes=vmem_limit)
    return tm, tk, k_steps, prep, params


# ------------------------------ wrappers -------------------------------------

def gram_matrix(x, *, precision="float32", row_block=None, k_block=None):
    """Pallas gram matrix of an NCHW tensor: (F F^T) / (a*b*c*d), f32 output."""
    feats, M, K, scale = _as_feature_matrix(x)
    vmem_limit = _vmem_limit_bytes()
    itemsize = jnp.dtype(feats.dtype).itemsize
    tm, tk, k_steps, prep, params = _plan(
        M, K, itemsize, vmem_limit, precision == "bfloat16", row_block, k_block)

    if tm is None:
        return pl.pallas_call(
            functools.partial(_gram_kernel, scale=scale, prep=prep),
            out_shape=jax.ShapeDtypeStruct((M, M), jnp.float32),
            grid_spec=pltpu.PrefetchScalarGridSpec(
                num_scalar_prefetch=0,
                grid=(k_steps,),
                in_specs=[pl.BlockSpec((M, tk), lambda k: (0, k))],       # F K-tile
                out_specs=pl.BlockSpec((M, M), lambda k: (0, 0))),        # resident acc
            compiler_params=params,
        )(feats)

    return pl.pallas_call(
        functools.partial(_gram_rows_kernel, scale=scale, prep=prep),
        out_shape=jax.ShapeDtypeStruct((M, M), jnp.float32),
        grid_spec=pltpu.PrefetchScalarGridSpec(
            num_scalar_prefetch=0,
            grid=(M // tm, k_steps),
            in_specs=[pl.BlockSpec((tm, tk), lambda i, k: (i, k)),        # row block
                      pl.BlockSpec((M, tk), lambda i, k: (0, k))],        # all rows
            out_specs=pl.BlockSpec((tm, M), lambda i, k: (i, 0))),
        compiler_params=params,
    )(feats, feats)


def style_loss(x, target_gram, *, precision="float32", row_block=None, k_block=None):
    """MSE(gram(x), target_gram) as one fused Pallas kernel (no (M,M) writeback)."""
    feats, M, K, scale = _as_feature_matrix(x)
    target = jnp.asarray(target_gram, jnp.float32)
    if target.shape != (M, M):
        raise ValueError(f"target gram must have shape {(M, M)}, got {target.shape}")
    vmem_limit = _vmem_limit_bytes()
    itemsize = jnp.dtype(feats.dtype).itemsize
    inv_n = 1.0 / float(M * M)
    tm, tk, k_steps, prep, params = _plan(
        M, K, itemsize, vmem_limit, precision == "bfloat16", row_block, k_block)

    if tm is None:
        partials = pl.pallas_call(
            functools.partial(_loss_kernel, scale=scale, inv_n=inv_n, prep=prep),
            out_shape=jax.ShapeDtypeStruct((1, 8, 128), jnp.float32),
            grid_spec=pltpu.PrefetchScalarGridSpec(
                num_scalar_prefetch=0,
                grid=(k_steps,),
                in_specs=[
                    pl.BlockSpec((M, tk), lambda k: (0, k)),              # F K-tile
                    # Resident target: index never changes -> single buffer.
                    pl.BlockSpec((M, M), lambda k: (0, 0),
                                 pipeline_mode=pl.Buffered(1)),
                ],
                out_specs=pl.BlockSpec((1, 8, 128), lambda k: (0, 0, 0)),
                scratch_shapes=[pltpu.VMEM((M, M), jnp.float32)]),        # gram acc
            compiler_params=params,
        )(feats, target)
        return partials[0, 0, 0]

    nb = M // tm
    partials = pl.pallas_call(
        functools.partial(_loss_rows_kernel, scale=scale, inv_n=inv_n, prep=prep),
        out_shape=jax.ShapeDtypeStruct((nb, 8, 128), jnp.float32),
        grid_spec=pltpu.PrefetchScalarGridSpec(
            num_scalar_prefetch=0,
            grid=(nb, k_steps),
            in_specs=[
                pl.BlockSpec((tm, tk), lambda i, k: (i, k)),              # row block
                pl.BlockSpec((M, tk), lambda i, k: (0, k)),               # all rows
                pl.BlockSpec((tm, M), lambda i, k: (i, 0),
                             pipeline_mode=pl.Buffered(1)),               # target rows
            ],
            out_specs=pl.BlockSpec((1, 8, 128), lambda i, k: (i, 0, 0)),
            scratch_shapes=[pltpu.VMEM((tm, M), jnp.float32)]),
        compiler_params=params,
    )(feats, feats, target)
    return jnp.sum(partials[:, 0, 0])


class StyleLossPallas:
    """JAX/Pallas port of the PyTorch StyleLoss module (forward pass)."""

    def __init__(self, target_feature, *, precision="float32"):
        self.precision = precision
        # .detach() -> stop_gradient; target gram computed once (gram-only kernel).
        self.target = jax.lax.stop_gradient(
            gram_matrix(target_feature, precision=precision))
        self.loss = None

    def __call__(self, x):
        # Loss-only kernel: gram stays in VMEM scratch, no (M, M) HBM writeback.
        self.loss = style_loss(x, self.target, precision=self.precision)
        return x                      # forward returns the input unchanged


# --------------------------------- demo --------------------------------------

if __name__ == "__main__":
    key = jax.random.PRNGKey(0)
    ks = jax.random.split(key, 5)

    def ref_gram(t):
        a, b, c, d = t.shape
        f = t.reshape(a * b, c * d).astype(jnp.float32)
        g = jnp.dot(f, f.T, precision=jax.lax.Precision.HIGHEST)
        return g / (a * b * c * d)

    # --- main module check (batch=2, channels=4, spatial=16) ------------------
    target_feature = jax.random.normal(ks[0], (2, 4, 16, 16), dtype=jnp.float32)
    x = jax.random.normal(ks[1], (2, 4, 16, 16), dtype=jnp.float32)

    module = StyleLossPallas(target_feature)
    out = jax.block_until_ready(module(x))
    loss = jax.block_until_ready(module.loss)

    ref_loss = jnp.mean((ref_gram(x) - ref_gram(target_feature)) ** 2)
    assert out.shape == x.shape and bool(jnp.allclose(out, x))
    assert bool(jnp.allclose(loss, ref_loss, rtol=1e-3, atol=1e-6)), (loss, ref_loss)

    # --- ragged-K in-kernel masking (K = 144, forced K tile of 128) -----------
    y = jax.random.normal(ks[2], (2, 4, 12, 12), dtype=jnp.float32)
    g = jax.block_until_ready(gram_matrix(y, k_block=128))
    assert bool(jnp.allclose(g, ref_gram(y), rtol=1e-3, atol=1e-5))

    # --- row-tiled ("parallel" rows) path, exercised at tiny shapes -----------
    t2 = jax.random.normal(ks[3], (2, 8, 16, 16), dtype=jnp.float32)   # M = 16
    x2 = jax.random.normal(ks[4], (2, 8, 16, 16), dtype=jnp.float32)
    g2 = jax.block_until_ready(gram_matrix(t2, row_block=8, k_block=128))
    assert bool(jnp.allclose(g2, ref_gram(t2), rtol=1e-3, atol=1e-5))
    l2 = jax.block_until_ready(
        style_loss(x2, ref_gram(t2), row_block=8, k_block=128))
    ref_l2 = jnp.mean((ref_gram(x2) - ref_gram(t2)) ** 2)
    assert bool(jnp.allclose(l2, ref_l2, rtol=1e-3, atol=1e-6)), (l2, ref_l2)

    print("KERNEL_OK")
</pallas_src>

<mosaic_0001>
module attributes {stable_mosaic.version = 11 : i64} {
  func.func @_gram_kernel(%arg0: i32, %arg1: memref<8x256xf32, #tpu.memory_space<vmem>>, %arg2: memref<8x8xf32, #tpu.memory_space<vmem>>) attributes {dimension_semantics = [#tpu.dimension_semantics<arbitrary>], iteration_bounds = array<i64: 1>, scalar_prefetch = 0 : i64, scratch_operands = 0 : i64, tpu.core_type = #tpu.core_type<tc>, window_params = [{transform_indices = @transform_0, window_bounds = array<i64: 8, 256>}, {pipeline_mode = #tpu.pipeline_mode<synchronous>, transform_indices = @transform_1, window_bounds = array<i64: 8, 8>}]} {
    %c0_i32 = arith.constant 0 : i32
    %0 = arith.cmpi eq, %arg0, %c0_i32 : i32
    %1 = arith.extui %0 : i1 to i32
    %c0_i32_0 = arith.constant 0 : i32
    %2 = arith.cmpi ne, %1, %c0_i32_0 : i32
    scf.if %2 {
      %cst_8 = arith.constant 0.000000e+00 : f32
      %11 = vector.broadcast %cst_8 : f32 to vector<8x8xf32>
      %c0_9 = arith.constant 0 : index
      %c0_10 = arith.constant 0 : index
      %12 = vector.load %arg2[%c0_9, %c0_10] : memref<8x8xf32, #tpu.memory_space<vmem>>, vector<8x8xf32>
      tpu.vector_store %arg2[%c0_9, %c0_10], %11 {strides = array<i32>} : memref<8x8xf32, #tpu.memory_space<vmem>>, vector<8x8xf32>,
    } else {
    }
    %c0 = arith.constant 0 : index
    %c0_1 = arith.constant 0 : index
    %3 = vector.load %arg1[%c0, %c0_1] : memref<8x256xf32, #tpu.memory_space<vmem>>, vector<8x256xf32>
    %c0_2 = arith.constant 0 : index
    %c0_3 = arith.constant 0 : index
    %4 = vector.load %arg2[%c0_2, %c0_3] : memref<8x8xf32, #tpu.memory_space<vmem>>, vector<8x8xf32>
    %cst = arith.constant dense<0.000000e+00> : vector<8x8xf32>
    %5 = tpu.matmul %3, %3, %cst {dimension_numbers = #tpu.dot_dimension_numbers<[1], [1], [0], [0], [0, 0, 1, 0], [], []>} : vector<8x256xf32>, vector<8x256xf32>, vector<8x8xf32> -> vector<8x8xf32>
    %6 = arith.addf %4, %5 : vector<8x8xf32>
    %c0_4 = arith.constant 0 : index
    %c0_5 = arith.constant 0 : index
    %7 = vector.load %arg2[%c0_4, %c0_5] : memref<8x8xf32, #tpu.memory_space<vmem>>, vector<8x8xf32>
    tpu.vector_store %arg2[%c0_4, %c0_5], %6 {strides = array<i32>} : memref<8x8xf32, #tpu.memory_space<vmem>>, vector<8x8xf32>,
    %c0_i32_6 = arith.constant 0 : i32
    %8 = arith.cmpi eq, %arg0, %c0_i32_6 : i32
    %9 = arith.extui %8 : i1 to i32
    %c0_i32_7 = arith.constant 0 : i32
    %10 = arith.cmpi ne, %9, %c0_i32_7 : i32
    scf.if %10 {
      %c0_8 = arith.constant 0 : index
      %c0_9 = arith.constant 0 : index
      %11 = vector.load %arg2[%c0_8, %c0_9] : memref<8x8xf32, #tpu.memory_space<vmem>>, vector<8x8xf32>
      %cst_10 = arith.constant 4.8828125E-4 : f32
      %12 = vector.broadcast %cst_10 : f32 to vector<8x8xf32>
      %13 = arith.mulf %11, %12 : vector<8x8xf32>
      %c0_11 = arith.constant 0 : index
      %c0_12 = arith.constant 0 : index
      %14 = vector.load %arg2[%c0_11, %c0_12] : memref<8x8xf32, #tpu.memory_space<vmem>>, vector<8x8xf32>
      tpu.vector_store %arg2[%c0_11, %c0_12], %13 {strides = array<i32>} : memref<8x8xf32, #tpu.memory_space<vmem>>, vector<8x8xf32>,
    } else {
    }
    return
  }
  func.func @transform_0(%arg0: i32) -> (i32, i32) {
    %c0_i32 = arith.constant 0 : i32
    %c0_i32_0 = arith.constant 0 : i32
    return %c0_i32, %arg0 : i32, i32
  }
  func.func @transform_1(%arg0: i32) -> (i32, i32) {
    %c0_i32 = arith.constant 0 : i32
    %c0_i32_0 = arith.constant 0 : i32
    %c0_i32_1 = arith.constant 0 : i32
    return %c0_i32, %c0_i32_0 : i32, i32
  }
}

</mosaic_0001>

<llo_original>
// kernel: tpu_custom_call.1
$region0: #{tpu_custom_call.1}
  #allocation0 [shape = 'u32[]', space=smem, size = 0x4, offset = 0x4, fixed_abs, tag = 'smem constant byte address 0x4 - core index']
  #allocation1 [shape = 'u32[144,128]{1,0:T(1,128)}', space=vmem, size = 0x12000, scoped, tag = 'internal scratch']
  %s0 = inlined_call_operand.hbm [shape: f32[8,256], index: 0, kind: input, shape index: {}]
  %s1 = inlined_call_operand.hbm [shape: f32[8,8], index: 1, kind: output, shape index: {}]
  %s2 = sld [smem:[#allocation0]]
  $region26: #{tpu_custom_call.1} parent=0
    _
  %s4 = ssub.s32 1, %s2
  %s5 = scalar_select 0, %s4, %s2
  $region1: #{tpu_custom_call.1} parent=0
    #allocation2 [shape = 'u8[8192]{0}', space=vmem, size = 0x2000, scoped, tag = 'input window, operand 0, single buffered']
    #allocation3 [shape = 's32[1]{0}', space=sflag, size = 0x4, scoped, tag = 'scoped memory for tpu_custom_call.1']
    #allocation4 [shape = 's32[1]{0}', space=sflag, size = 0x4, scoped, tag = 'scoped memory for tpu_custom_call.1']
    #allocation5 [shape = 'u8[4096]{0}', space=vmem, size = 0x1000, scoped, tag = 'output window, operand 0, single buffered']
    %6 = vsyncpa [#allocation3], 0
    %7 = vsyncpa [#allocation4], 0
    // Predicated region
    $region2: #{tpu_custom_call.1} parent=1 // pred_check
      _
    $region3: #{tpu_custom_call.1} parent=1 // pred_check_branch
      %9 = sbr.rel (0) target = $region5
    $region4: #{tpu_custom_call.1} parent=1 // pred_region
      %s11 = ssub.s32 256, 256
      %12 = vsyncadd [#allocation3], %s11
      %s14 = sshll.u32 [#allocation2], 4
      %s15 = int_to_ptr.vmem [resolvable:$true] %s14
      %17 = dma.hbm_to_vmem [thread:$0]  %s0, 256, %s15, [#allocation3]
    $region5: #{tpu_custom_call.1} parent=1 // pred_fallthru
      _
    // Predicated region
    $region6: #{tpu_custom_call.1} parent=1 // pred_check
      _
    $region7: #{tpu_custom_call.1} parent=1 // pred_check_branch
      %19 = sbr.rel (0) target = $region9
    $region8: #{tpu_custom_call.1} parent=1 // pred_region
      %20 = dma.done [#allocation3], 256
    $region9: #{tpu_custom_call.1} parent=1 // pred_fallthru
      _
    %p21 = scmp.eq.s32.totalorder 0, 0
    // Predicated region
    $region10: #{tpu_custom_call.1} parent=1 // pred_check
      %p22 = pneg %p21
    $region11: #{tpu_custom_call.1} parent=1 // pred_check_branch
      %24 = sbr.rel (%p22) target = $region13
    $region12: #{tpu_custom_call.1} parent=1 // pred_region
      %vm25 = vcmask 64512
      %26 = vst.msk [vmem:[#allocation5] sm:$0xff] %vm25, 0.0
    $region13: #{tpu_custom_call.1} parent=1 // pred_fallthru
      _
    %v27 = vld [vmem:[#allocation2] sm:$0xff]
    %v28 = vld [vmem:[#allocation2 + $0x8] sm:$0xff]
    %v29 = vld [vmem:[#allocation5] sm:$0xff]
    %30 = vmatprep.subr.mxu0 %v28
    %31 = vmatpush1.xpose.msra.mxu0 %v27
    %32 = vmatprep.subr.mxu0 0.0
    %33 = vmatpush1.xpose.msra.mxu0 0.0
    %34 = vmatprep.subr.mxu0 0.0
    %35 = vmatpush1.xpose.msra.mxu0 0.0
    %36 = vmatprep.subr.mxu0 0.0
    %37 = vmatpush1.xpose.msra.mxu0 0.0
    %38 = vmatprep.subr.mxu0 0.0
    %39 = vmatpush1.xpose.msra.mxu0 0.0
    %40 = vmatprep.subr.mxu0 0.0
    %41 = vmatpush1.xpose.msra.mxu0 0.0
    %42 = vmatprep.subr.mxu0 0.0
    %43 = vmatpush1.xpose.msra.mxu0 0.0
    %44 = vmatprep.subr.mxu0 0.0
    %45 = vmatpush1.xpose.msra.mxu0 0.0
    %46 = vmatprep.subr.mxu0 0.0
    %47 = vmatpush1.xpose.msra.mxu0 0.0
    %48 = vmatprep.subr.mxu0 0.0
    %49 = vmatpush1.xpose.msra.mxu0 0.0
    %50 = vmatprep.subr.mxu0 0.0
    %51 = vmatpush1.xpose.msra.mxu0 0.0
    %52 = vmatprep.subr.mxu0 0.0
    %53 = vmatpush1.xpose.msra.mxu0 0.0
    %54 = vmatprep.subr.mxu0 0.0
    %55 = vmatpush1.xpose.msra.mxu0 0.0
    %56 = vmatprep.subr.mxu0 0.0
    %57 = vmatpush1.xpose.msra.mxu0 0.0
    %58 = vmatprep.subr.mxu0 0.0
    %59 = vmatpush1.xpose.msra.mxu0 0.0
    %60 = vmatprep.subr.mxu0 0.0
    %61 = vmatpush1.xpose.msra.mxu0 0.0
    %62 = vmatprep.subr.mxu0 0.0
    %63 = vmatpush1.xpose.msra.mxu0 0.0
    %64 = vmatprep.subr.mxu0 0.0
    %65 = vmatpush1.xpose.msra.mxu0 0.0
    %66 = vmatprep.subr.mxu0 0.0
    %67 = vmatpush1.xpose.msra.mxu0 0.0
    %68 = vmatprep.subr.mxu0 0.0
    %69 = vmatpush1.xpose.msra.mxu0 0.0
    %70 = vmatprep.subr.mxu0 0.0
    %71 = vmatpush1.xpose.msra.mxu0 0.0
    %72 = vmatprep.subr.mxu0 0.0
    %73 = vmatpush1.xpose.msra.mxu0 0.0
    %74 = vmatprep.subr.mxu0 0.0
    %75 = vmatpush1.xpose.msra.mxu0 0.0
    %76 = vmatprep.subr.mxu0 0.0
    %77 = vmatpush1.xpose.msra.mxu0 0.0
    %78 = vmatprep.subr.mxu0 0.0
    %79 = vmatpush1.xpose.msra.mxu0 0.0
    %80 = vmatprep.subr.mxu0 0.0
    %81 = vmatpush1.xpose.msra.mxu0 0.0
    %82 = vmatprep.subr.mxu0 0.0
    %83 = vmatpush1.xpose.msra.mxu0 0.0
    %84 = vmatprep.subr.mxu0 0.0
    %85 = vmatpush1.xpose.msra.mxu0 0.0
    %86 = vmatprep.subr.mxu0 0.0
    %87 = vmatpush1.xpose.msra.mxu0 0.0
    %88 = vmatprep.subr.mxu0 0.0
    %89 = vmatpush1.xpose.msra.mxu0 0.0
    %90 = vmatprep.subr.mxu0 0.0
    %91 = vmatpush1.xpose.msra.mxu0 0.0
    %92 = vmatprep.subr.mxu0 0.0
    %93 = vmatpush1.xpose.msra.mxu0 0.0
    %94 = vmatprep.mubr.f32.mxu0 %v28
    %95 = vmatmul.mubr.f32.gmra.mrb[0].mxu0 %v27
    %v96 = vpop.f32.mrb[0].mxu0
    %v97 = vadd.f32 0.0, %v96
    %v98 = vpop.f32.mrb[0].mxu0
    %99 = vdwg.mxu0
    %v100 = vadd.f32 %v29, %v97
    %vm101 = vcmask 64512
    %102 = vst.msk [vmem:[#allocation5] sm:$0xff] %vm101, %v100
    // Predicated region
    $region14: #{tpu_custom_call.1} parent=1 // pred_check
      %p103 = pneg %p21
    $region15: #{tpu_custom_call.1} parent=1 // pred_check_branch
      %105 = sbr.rel (%p103) target = $region17
    $region16: #{tpu_custom_call.1} parent=1 // pred_region
      %v106 = vld [vmem:[#allocation5] sm:$0xff]
      %v107 = vmul.f32 %v106, 0.00048828125
      %108 = vst.msk [vmem:[#allocation5] sm:$0xff] %vm101, %v107
    $region17: #{tpu_custom_call.1} parent=1 // pred_fallthru
      _
    // Predicated region
    $region18: #{tpu_custom_call.1} parent=1 // pred_check
      _
    $region19: #{tpu_custom_call.1} parent=1 // pred_check_branch
      %110 = sbr.rel (0) target = $region21
    $region20: #{tpu_custom_call.1} parent=1 // pred_region
      %s112 = ssub.s32 128, 128
      %113 = vsyncadd [#allocation4], %s112
      %s115 = sshll.u32 [#allocation5], 4
      %s116 = int_to_ptr.vmem [resolvable:$true] %s115
      %118 = dma.vmem_to_hbm [thread:$0]  %s116, 128, %s1, [#allocation4]
    $region21: #{tpu_custom_call.1} parent=1 // pred_fallthru
      _
    // Predicated region
    $region22: #{tpu_custom_call.1} parent=1 // pred_check
      _
    $region23: #{tpu_custom_call.1} parent=1 // pred_check_branch
      %120 = sbr.rel (0) target = $region25
    $region24: #{tpu_custom_call.1} parent=1 // pred_region
      %121 = dma.done [#allocation4], 128
    $region25: #{tpu_custom_call.1} parent=1 // pred_fallthru
      _
    %122 = vsyncpa [#allocation3], 1
    %123 = vsyncpa [#allocation4], 1

</llo_original>
